<compile_context>
chip_gen: v5e
topology: v5e:2x2
jax: 0.10.0
libtpu: 0.0.40
codegen_flags: <defaults>
</compile_context>

<pallas_src>
import jax
import jax.numpy as jnp
from jax import lax
from jax.experimental import pallas as pl
from jax.experimental.pallas import tpu as pltpu


_NT = (((1,), (1,)), ((), ()))  # contract last axis of both operands: A @ B.T


def rnn_fc_kernel(x_ref, wih0_ref, whh0_ref, b0_ref,
                  wih1_ref, whh1_ref, b1_ref,
                  wfc_ref, bfc_ref, out_ref,
                  h0_ref, h1_ref, acc_ref):
    """One timestep of the 2-layer tanh RNN with in-loop fc accumulation.

    x_ref   : (bm, D)  bf16   input block for this timestep (time dim squeezed)
    wih0_ref: (H, D)   bf16   layer-0 input weights  (PyTorch layout)
    whh0_ref: (H, H)   bf16   layer-0 hidden weights (PyTorch layout)
    b0_ref  : (1, H)   f32    b_ih0 + b_hh0
    wih1_ref: (H, H)   bf16   layer-1 input weights
    whh1_ref: (H, H)   bf16   layer-1 hidden weights
    b1_ref  : (1, H)   f32    b_ih1 + b_hh1
    wfc_ref : (C, H)   bf16   fc weight slice for this timestep (lane-dense H)
    bfc_ref : (1, C)   f32    fc bias
    out_ref : (bm, C)  f32    logits for this batch block
    h0/h1   : (bm, H)  f32    scratch recurrent state
    acc_ref : (bm, C)  f32    scratch fc accumulator
    """
    t = pl.program_id(1)
    f32 = jnp.float32

    @pl.when(t == 0)
    def _init():
        h0_ref[...] = jnp.zeros_like(h0_ref)
        h1_ref[...] = jnp.zeros_like(h1_ref)
        acc_ref[...] = jnp.zeros_like(acc_ref)

    # Layer 0: h0 = tanh(x_t @ Wih0^T + h0 @ Whh0^T + b0)  (f32 accumulation)
    pre0 = (lax.dot_general(x_ref[...], wih0_ref[...], _NT,
                            preferred_element_type=f32)
            + lax.dot_general(h0_ref[...].astype(whh0_ref.dtype), whh0_ref[...],
                              _NT, preferred_element_type=f32)
            + b0_ref[...])
    h0_new = jnp.tanh(pre0)

    # Layer 1: h1 = tanh(h0 @ Wih1^T + h1 @ Whh1^T + b1)
    pre1 = (lax.dot_general(h0_new.astype(wih1_ref.dtype), wih1_ref[...],
                            _NT, preferred_element_type=f32)
            + lax.dot_general(h1_ref[...].astype(whh1_ref.dtype), whh1_ref[...],
                              _NT, preferred_element_type=f32)
            + b1_ref[...])
    h1_new = jnp.tanh(pre1)

    h0_ref[...] = h0_new
    h1_ref[...] = h1_new

    # fc contribution of this timestep: acc[b, c] += sum_h h1[b, h] * Wfc[c, t*H + h]
    acc_ref[...] += lax.dot_general(h1_new.astype(wfc_ref.dtype), wfc_ref[...],
                                    _NT, preferred_element_type=f32)

    @pl.when(t == pl.num_programs(1) - 1)
    def _finalize():
        out_ref[...] = acc_ref[...] + bfc_ref[...]


def _vmem_limit_bytes():
    """~85% of this chip's VMEM (v5e/v6e: 128 MiB, v7x: 64 MiB per TC)."""
    try:
        return int(pltpu.get_tpu_info().vmem_capacity_bytes * 0.85)
    except Exception:
        return 48 * 1024 * 1024


def rnn_forward(x, params, *, block_b=None, compute_dtype=jnp.bfloat16):
    """x: (B, T, D) -> (B, num_classes) f32 logits.

    Matches torch: nn.RNN(tanh, 2 layers, batch_first=True) with zero initial
    state, then Linear(hidden*seq -> classes) on the flattened layer-1 outputs.
    Matmul operands are cast to `compute_dtype` (bf16 by default); tanh,
    accumulation and the recurrent state stay in f32.
    """
    B, T, D = x.shape
    H = params["whh0"].shape[0]
    C = params["wfc"].shape[0]
    bm = B if block_b is None else block_b
    assert B % bm == 0 and (bm == B or bm % 8 == 0), (B, bm)

    f32 = jnp.float32
    cd = compute_dtype

    # Time-major input, streamed one (bm, D) block per grid step.
    x_tm = jnp.transpose(x.astype(cd), (1, 0, 2))                  # (T, B, D)

    # Weights keep the PyTorch (out, in) layout -- no transposes, just a cast.
    wih0 = params["wih0"].astype(cd)                               # (H, D)
    whh0 = params["whh0"].astype(cd)                               # (H, H)
    wih1 = params["wih1"].astype(cd)                               # (H, H)
    whh1 = params["whh1"].astype(cd)                               # (H, H)
    b0 = (params["bih0"] + params["bhh0"]).astype(f32).reshape(1, H)
    b1 = (params["bih1"] + params["bhh1"]).astype(f32).reshape(1, H)
    # fc weight (C, T*H) -> (T, C, H): wfc3[t, c, h] = W[c, t*H + h]; lane-dense
    # in H so each streamed (C, H) slice pads only C -> 8 sublanes.
    wfc3 = jnp.transpose(params["wfc"].reshape(C, T, H), (1, 0, 2)).astype(cd)
    bfc = params["bfc"].astype(f32).reshape(1, C)

    def full(shape):
        # Fully-resident operand: whole-array block, constant index map.
        return pl.BlockSpec(shape, lambda b, t, _s=shape: (0,) * len(_s))

    grid_spec = pltpu.PrefetchScalarGridSpec(
        num_scalar_prefetch=0,
        grid=(B // bm, T),
        in_specs=[
            pl.BlockSpec((None, bm, D), lambda b, t: (t, b, 0)),   # x_t (streamed)
            full((H, D)),                                          # wih0
            full((H, H)),                                          # whh0
            full((1, H)),                                          # b0
            full((H, H)),                                          # wih1
            full((H, H)),                                          # whh1
            full((1, H)),                                          # b1
            pl.BlockSpec((None, C, H), lambda b, t: (t, 0, 0)),    # wfc_t (streamed)
            full((1, C)),                                          # bfc
        ],
        out_specs=pl.BlockSpec((bm, C), lambda b, t: (b, 0)),
        scratch_shapes=[
            pltpu.VMEM((bm, H), f32),   # h0
            pltpu.VMEM((bm, H), f32),   # h1
            pltpu.VMEM((bm, C), f32),   # fc accumulator
        ],
    )

    return pl.pallas_call(
        rnn_fc_kernel,
        out_shape=jax.ShapeDtypeStruct((B, C), f32),
        grid_spec=grid_spec,
        compiler_params=pltpu.CompilerParams(
            dimension_semantics=("parallel", "arbitrary"),
            vmem_limit_bytes=_vmem_limit_bytes(),
        ),
    )(x_tm, wih0, whh0, b0, wih1, whh1, b1, wfc3, bfc)


def rnn_reference(x, params, compute_dtype=jnp.bfloat16):
    """Pure-JAX reference for torch.nn.RNN(tanh, 2 layers, batch_first) + fc,
    applying the same `compute_dtype` quantization of matmul operands that the
    kernel applies (tanh / accumulation / state in f32)."""
    f32 = jnp.float32
    q = lambda a: a.astype(compute_dtype).astype(f32)
    x = x.astype(f32)
    B, T, _ = x.shape
    H = params["whh0"].shape[0]
    wih0, whh0 = q(params["wih0"]), q(params["whh0"])
    wih1, whh1 = q(params["wih1"]), q(params["whh1"])
    wfc = q(params["wfc"])
    b0 = params["bih0"] + params["bhh0"]
    b1 = params["bih1"] + params["bhh1"]
    h0 = jnp.zeros((B, H), f32)
    h1 = jnp.zeros((B, H), f32)
    outs = []
    for t in range(T):
        xt = q(x[:, t, :])
        h0 = jnp.tanh(xt @ wih0.T + q(h0) @ whh0.T + b0)
        h1 = jnp.tanh(q(h0) @ wih1.T + q(h1) @ whh1.T + b1)
        outs.append(h1)
    hseq = jnp.stack(outs, axis=1).reshape(B, -1)                  # (B, T*H)
    return q(hseq) @ wfc.T + params["bfc"]


def init_params(key, input_size, hidden_size, seq_len, num_classes):
    ks = jax.random.split(key, 10)
    s_rnn = 1.0 / jnp.sqrt(hidden_size)
    s_fc = 1.0 / jnp.sqrt(hidden_size * seq_len)
    u = lambda k, shape, s: jax.random.uniform(k, shape, jnp.float32, -s, s)
    return {
        # layer 0
        "wih0": u(ks[0], (hidden_size, input_size), s_rnn),
        "whh0": u(ks[1], (hidden_size, hidden_size), s_rnn),
        "bih0": u(ks[2], (hidden_size,), s_rnn),
        "bhh0": u(ks[3], (hidden_size,), s_rnn),
        # layer 1
        "wih1": u(ks[4], (hidden_size, hidden_size), s_rnn),
        "whh1": u(ks[5], (hidden_size, hidden_size), s_rnn),
        "bih1": u(ks[6], (hidden_size,), s_rnn),
        "bhh1": u(ks[7], (hidden_size,), s_rnn),
        # fc: Linear(hidden_size * seq_len, num_classes)
        "wfc": u(ks[8], (num_classes, hidden_size * seq_len), s_fc),
        "bfc": u(ks[9], (num_classes,), s_fc),
    }


if __name__ == "__main__":
    # Small stand-ins for input_size=700, hidden=2000, seq=350, classes=3.
    B, T, D, H, C = 2, 8, 16, 32, 3

    key = jax.random.PRNGKey(0)
    k_x, k_p = jax.random.split(key)
    x = jax.random.normal(k_x, (B, T, D), jnp.float32)
    params = init_params(k_p, D, H, T, C)

    out = jax.block_until_ready(rnn_forward(x, params))
    ref = jax.block_until_ready(rnn_reference(x, params))

    assert out.shape == (B, C), out.shape
    # Reference applies the same intentional bf16 quantization of matmul
    # operands, so the comparison is tight; vs. a pure-f32 torch forward the
    # only difference is that quantization.
    assert jnp.allclose(out, ref, rtol=1e-3, atol=1e-3), (out, ref)
    print("KERNEL_OK")
</pallas_src>

<mosaic_0001>
module attributes {stable_mosaic.version = 11 : i64} {
  func.func @rnn_fc_kernel(%arg0: i32, %arg1: i32, %arg2: memref<1x2x16xbf16, #tpu.memory_space<vmem>>, %arg3: memref<32x16xbf16, #tpu.memory_space<vmem>>, %arg4: memref<32x32xbf16, #tpu.memory_space<vmem>>, %arg5: memref<1x32xf32, #tpu.memory_space<vmem>>, %arg6: memref<32x32xbf16, #tpu.memory_space<vmem>>, %arg7: memref<32x32xbf16, #tpu.memory_space<vmem>>, %arg8: memref<1x32xf32, #tpu.memory_space<vmem>>, %arg9: memref<1x3x32xbf16, #tpu.memory_space<vmem>>, %arg10: memref<1x3xf32, #tpu.memory_space<vmem>>, %arg11: memref<2x3xf32, #tpu.memory_space<vmem>>, %arg12: memref<2x32xf32, #tpu.memory_space<vmem>>, %arg13: memref<2x32xf32, #tpu.memory_space<vmem>>, %arg14: memref<2x3xf32, #tpu.memory_space<vmem>>) attributes {dimension_semantics = [#tpu.dimension_semantics<parallel>, #tpu.dimension_semantics<arbitrary>], iteration_bounds = array<i64: 1, 8>, scalar_prefetch = 0 : i64, scratch_operands = 3 : i64, tpu.core_type = #tpu.core_type<tc>, window_params = [{transform_indices = @transform_0, window_bounds = array<i64: 1, 2, 16>}, {pipeline_mode = #tpu.pipeline_mode<synchronous>, transform_indices = @transform_1, window_bounds = array<i64: 32, 16>}, {pipeline_mode = #tpu.pipeline_mode<synchronous>, transform_indices = @transform_2, window_bounds = array<i64: 32, 32>}, {pipeline_mode = #tpu.pipeline_mode<synchronous>, transform_indices = @transform_3, window_bounds = array<i64: 1, 32>}, {pipeline_mode = #tpu.pipeline_mode<synchronous>, transform_indices = @transform_4, window_bounds = array<i64: 32, 32>}, {pipeline_mode = #tpu.pipeline_mode<synchronous>, transform_indices = @transform_5, window_bounds = array<i64: 32, 32>}, {pipeline_mode = #tpu.pipeline_mode<synchronous>, transform_indices = @transform_6, window_bounds = array<i64: 1, 32>}, {transform_indices = @transform_7, window_bounds = array<i64: 1, 3, 32>}, {pipeline_mode = #tpu.pipeline_mode<synchronous>, transform_indices = @transform_8, window_bounds = array<i64: 1, 3>}, {transform_indices = @transform_9, window_bounds = array<i64: 2, 3>}]} {
    %c0_i32 = arith.constant 0 : i32
    %0 = arith.cmpi eq, %arg1, %c0_i32 : i32
    %1 = arith.extui %0 : i1 to i32
    %c0_i32_0 = arith.constant 0 : i32
    %2 = arith.cmpi ne, %1, %c0_i32_0 : i32
    scf.if %2 {
      %cst_35 = arith.constant 0.000000e+00 : f32
      %40 = vector.broadcast %cst_35 : f32 to vector<2x32xf32>
      %c0_36 = arith.constant 0 : index
      %c0_37 = arith.constant 0 : index
      %41 = vector.load %arg12[%c0_36, %c0_37] : memref<2x32xf32, #tpu.memory_space<vmem>>, vector<2x32xf32>
      tpu.vector_store %arg12[%c0_36, %c0_37], %40 {strides = array<i32>} : memref<2x32xf32, #tpu.memory_space<vmem>>, vector<2x32xf32>,
      %cst_38 = arith.constant 0.000000e+00 : f32
      %42 = vector.broadcast %cst_38 : f32 to vector<2x32xf32>
      %c0_39 = arith.constant 0 : index
      %c0_40 = arith.constant 0 : index
      %43 = vector.load %arg13[%c0_39, %c0_40] : memref<2x32xf32, #tpu.memory_space<vmem>>, vector<2x32xf32>
      tpu.vector_store %arg13[%c0_39, %c0_40], %42 {strides = array<i32>} : memref<2x32xf32, #tpu.memory_space<vmem>>, vector<2x32xf32>,
      %cst_41 = arith.constant 0.000000e+00 : f32
      %44 = vector.broadcast %cst_41 : f32 to vector<2x3xf32>
      %c0_42 = arith.constant 0 : index
      %c0_43 = arith.constant 0 : index
      %45 = vector.load %arg14[%c0_42, %c0_43] : memref<2x3xf32, #tpu.memory_space<vmem>>, vector<2x3xf32>
      tpu.vector_store %arg14[%c0_42, %c0_43], %44 {strides = array<i32>} : memref<2x3xf32, #tpu.memory_space<vmem>>, vector<2x3xf32>,
    } else {
    }
    %c0 = arith.constant 0 : index
    %c0_1 = arith.constant 0 : index
    %c0_2 = arith.constant 0 : index
    %3 = vector.load %arg2[%c0, %c0_1, %c0_2] : memref<1x2x16xbf16, #tpu.memory_space<vmem>>, vector<1x2x16xbf16>
    %4 = vector.shape_cast %3 : vector<1x2x16xbf16> to vector<2x16xbf16>
    %c0_3 = arith.constant 0 : index
    %c0_4 = arith.constant 0 : index
    %5 = vector.load %arg3[%c0_3, %c0_4] : memref<32x16xbf16, #tpu.memory_space<vmem>>, vector<32x16xbf16>
    %cst = arith.constant dense<0.000000e+00> : vector<2x32xf32>
    %6 = tpu.matmul %4, %5, %cst {dimension_numbers = #tpu.dot_dimension_numbers<[1], [1], [0], [0], [0, 0, 1, 0], [], []>} : vector<2x16xbf16>, vector<32x16xbf16>, vector<2x32xf32> -> vector<2x32xf32>
    %c0_5 = arith.constant 0 : index
    %c0_6 = arith.constant 0 : index
    %7 = vector.load %arg12[%c0_5, %c0_6] : memref<2x32xf32, #tpu.memory_space<vmem>>, vector<2x32xf32>
    %8 = arith.truncf %7 : vector<2x32xf32> to vector<2x32xbf16>
    %c0_7 = arith.constant 0 : index
    %c0_8 = arith.constant 0 : index
    %9 = vector.load %arg4[%c0_7, %c0_8] : memref<32x32xbf16, #tpu.memory_space<vmem>>, vector<32x32xbf16>
    %cst_9 = arith.constant dense<0.000000e+00> : vector<2x32xf32>
    %10 = tpu.matmul %8, %9, %cst_9 {dimension_numbers = #tpu.dot_dimension_numbers<[1], [1], [0], [0], [0, 0, 1, 0], [], []>} : vector<2x32xbf16>, vector<32x32xbf16>, vector<2x32xf32> -> vector<2x32xf32>
    %11 = arith.addf %6, %10 : vector<2x32xf32>
    %c0_10 = arith.constant 0 : index
    %c0_11 = arith.constant 0 : index
    %12 = vector.load %arg5[%c0_10, %c0_11] : memref<1x32xf32, #tpu.memory_space<vmem>>, vector<1x32xf32>
    %13 = vector.broadcast %12 : vector<1x32xf32> to vector<2x32xf32>
    %14 = arith.addf %11, %13 : vector<2x32xf32>
    %15 = math.tanh %14 : vector<2x32xf32>
    %16 = arith.truncf %15 : vector<2x32xf32> to vector<2x32xbf16>
    %c0_12 = arith.constant 0 : index
    %c0_13 = arith.constant 0 : index
    %17 = vector.load %arg6[%c0_12, %c0_13] : memref<32x32xbf16, #tpu.memory_space<vmem>>, vector<32x32xbf16>
    %cst_14 = arith.constant dense<0.000000e+00> : vector<2x32xf32>
    %18 = tpu.matmul %16, %17, %cst_14 {dimension_numbers = #tpu.dot_dimension_numbers<[1], [1], [0], [0], [0, 0, 1, 0], [], []>} : vector<2x32xbf16>, vector<32x32xbf16>, vector<2x32xf32> -> vector<2x32xf32>
    %c0_15 = arith.constant 0 : index
    %c0_16 = arith.constant 0 : index
    %19 = vector.load %arg13[%c0_15, %c0_16] : memref<2x32xf32, #tpu.memory_space<vmem>>, vector<2x32xf32>
    %20 = arith.truncf %19 : vector<2x32xf32> to vector<2x32xbf16>
    %c0_17 = arith.constant 0 : index
    %c0_18 = arith.constant 0 : index
    %21 = vector.load %arg7[%c0_17, %c0_18] : memref<32x32xbf16, #tpu.memory_space<vmem>>, vector<32x32xbf16>
    %cst_19 = arith.constant dense<0.000000e+00> : vector<2x32xf32>
    %22 = tpu.matmul %20, %21, %cst_19 {dimension_numbers = #tpu.dot_dimension_numbers<[1], [1], [0], [0], [0, 0, 1, 0], [], []>} : vector<2x32xbf16>, vector<32x32xbf16>, vector<2x32xf32> -> vector<2x32xf32>
    %23 = arith.addf %18, %22 : vector<2x32xf32>
    %c0_20 = arith.constant 0 : index
    %c0_21 = arith.constant 0 : index
    %24 = vector.load %arg8[%c0_20, %c0_21] : memref<1x32xf32, #tpu.memory_space<vmem>>, vector<1x32xf32>
    %25 = vector.broadcast %24 : vector<1x32xf32> to vector<2x32xf32>
    %26 = arith.addf %23, %25 : vector<2x32xf32>
    %27 = math.tanh %26 : vector<2x32xf32>
    %c0_22 = arith.constant 0 : index
    %c0_23 = arith.constant 0 : index
    %28 = vector.load %arg12[%c0_22, %c0_23] : memref<2x32xf32, #tpu.memory_space<vmem>>, vector<2x32xf32>
    tpu.vector_store %arg12[%c0_22, %c0_23], %15 {strides = array<i32>} : memref<2x32xf32, #tpu.memory_space<vmem>>, vector<2x32xf32>,
    %c0_24 = arith.constant 0 : index
    %c0_25 = arith.constant 0 : index
    %29 = vector.load %arg13[%c0_24, %c0_25] : memref<2x32xf32, #tpu.memory_space<vmem>>, vector<2x32xf32>
    tpu.vector_store %arg13[%c0_24, %c0_25], %27 {strides = array<i32>} : memref<2x32xf32, #tpu.memory_space<vmem>>, vector<2x32xf32>,
    %c0_26 = arith.constant 0 : index
    %c0_27 = arith.constant 0 : index
    %30 = vector.load %arg14[%c0_26, %c0_27] : memref<2x3xf32, #tpu.memory_space<vmem>>, vector<2x3xf32>
    %31 = arith.truncf %27 : vector<2x32xf32> to vector<2x32xbf16>
    %c0_28 = arith.constant 0 : index
    %c0_29 = arith.constant 0 : index
    %c0_30 = arith.constant 0 : index
    %32 = vector.load %arg9[%c0_28, %c0_29, %c0_30] : memref<1x3x32xbf16, #tpu.memory_space<vmem>>, vector<1x3x32xbf16>
    %33 = vector.shape_cast %32 : vector<1x3x32xbf16> to vector<3x32xbf16>
    %cst_31 = arith.constant dense<0.000000e+00> : vector<2x3xf32>
    %34 = tpu.matmul %31, %33, %cst_31 {dimension_numbers = #tpu.dot_dimension_numbers<[1], [1], [0], [0], [0, 0, 1, 0], [], []>} : vector<2x32xbf16>, vector<3x32xbf16>, vector<2x3xf32> -> vector<2x3xf32>
    %35 = arith.addf %30, %34 : vector<2x3xf32>
    %c0_32 = arith.constant 0 : index
    %c0_33 = arith.constant 0 : index
    %36 = vector.load %arg14[%c0_32, %c0_33] : memref<2x3xf32, #tpu.memory_space<vmem>>, vector<2x3xf32>
    tpu.vector_store %arg14[%c0_32, %c0_33], %35 {strides = array<i32>} : memref<2x3xf32, #tpu.memory_space<vmem>>, vector<2x3xf32>,
    %c7_i32 = arith.constant 7 : i32
    %37 = arith.cmpi eq, %arg1, %c7_i32 : i32
    %38 = arith.extui %37 : i1 to i32
    %c0_i32_34 = arith.constant 0 : i32
    %39 = arith.cmpi ne, %38, %c0_i32_34 : i32
    scf.if %39 {
      %c0_35 = arith.constant 0 : index
      %c0_36 = arith.constant 0 : index
      %40 = vector.load %arg14[%c0_35, %c0_36] : memref<2x3xf32, #tpu.memory_space<vmem>>, vector<2x3xf32>
      %c0_37 = arith.constant 0 : index
      %c0_38 = arith.constant 0 : index
      %41 = vector.load %arg10[%c0_37, %c0_38] : memref<1x3xf32, #tpu.memory_space<vmem>>, vector<1x3xf32>
      %42 = vector.broadcast %41 : vector<1x3xf32> to vector<2x3xf32>
      %43 = arith.addf %40, %42 : vector<2x3xf32>
      %c0_39 = arith.constant 0 : index
      %c0_40 = arith.constant 0 : index
      %44 = vector.load %arg11[%c0_39, %c0_40] : memref<2x3xf32, #tpu.memory_space<vmem>>, vector<2x3xf32>
      tpu.vector_store %arg11[%c0_39, %c0_40], %43 {strides = array<i32>} : memref<2x3xf32, #tpu.memory_space<vmem>>, vector<2x3xf32>,
    } else {
    }
    return
  }
  func.func @transform_0(%arg0: i32, %arg1: i32) -> (i32, i32, i32) {
    %c0_i32 = arith.constant 0 : i32
    %c0_i32_0 = arith.constant 0 : i32
    return %arg1, %arg0, %c0_i32 : i32, i32, i32
  }
  func.func @transform_1(%arg0: i32, %arg1: i32) -> (i32, i32) {
    %c0_i32 = arith.constant 0 : i32
    %c0_i32_0 = arith.constant 0 : i32
    %c0_i32_1 = arith.constant 0 : i32
    return %c0_i32, %c0_i32_0 : i32, i32
  }
  func.func @transform_2(%arg0: i32, %arg1: i32) -> (i32, i32) {
    %c0_i32 = arith.constant 0 : i32
    %c0_i32_0 = arith.constant 0 : i32
    %c0_i32_1 = arith.constant 0 : i32
    return %c0_i32, %c0_i32_0 : i32, i32
  }
  func.func @transform_3(%arg0: i32, %arg1: i32) -> (i32, i32) {
    %c0_i32 = arith.constant 0 : i32
    %c0_i32_0 = arith.constant 0 : i32
    %c0_i32_1 = arith.constant 0 : i32
    return %c0_i32, %c0_i32_0 : i32, i32
  }
  func.func @transform_4(%arg0: i32, %arg1: i32) -> (i32, i32) {
    %c0_i32 = arith.constant 0 : i32
    %c0_i32_0 = arith.constant 0 : i32
    %c0_i32_1 = arith.constant 0 : i32
    return %c0_i32, %c0_i32_0 : i32, i32
  }
  func.func @transform_5(%arg0: i32, %arg1: i32) -> (i32, i32) {
    %c0_i32 = arith.constant 0 : i32
    %c0_i32_0 = arith.constant 0 : i32
    %c0_i32_1 = arith.constant 0 : i32
    return %c0_i32, %c0_i32_0 : i32, i32
  }
  func.func @transform_6(%arg0: i32, %arg1: i32) -> (i32, i32) {
    %c0_i32 = arith.constant 0 : i32
    %c0_i32_0 = arith.constant 0 : i32
    %c0_i32_1 = arith.constant 0 : i32
    return %c0_i32, %c0_i32_0 : i32, i32
  }
  func.func @transform_7(%arg0: i32, %arg1: i32) -> (i32, i32, i32) {
    %c0_i32 = arith.constant 0 : i32
    %c0_i32_0 = arith.constant 0 : i32
    %c0_i32_1 = arith.constant 0 : i32
    return %arg1, %c0_i32, %c0_i32_0 : i32, i32, i32
  }
  func.func @transform_8(%arg0: i32, %arg1: i32) -> (i32, i32) {
    %c0_i32 = arith.constant 0 : i32
    %c0_i32_0 = arith.constant 0 : i32
    %c0_i32_1 = arith.constant 0 : i32
    return %c0_i32, %c0_i32_0 : i32, i32
  }
  func.func @transform_9(%arg0: i32, %arg1: i32) -> (i32, i32) {
    %c0_i32 = arith.constant 0 : i32
    %c0_i32_0 = arith.constant 0 : i32
    return %arg0, %c0_i32 : i32, i32
  }
}

</mosaic_0001>

<llo_original>
// kernel: tpu_custom_call.1
$region0: #{tpu_custom_call.1}
  #allocation0 [shape = 'u32[]', space=smem, size = 0x4, offset = 0x4, fixed_abs, tag = 'smem constant byte address 0x4 - core index']
  #allocation1 [shape = 'u32[72,128]{1,0:T(1,128)}', space=vmem, size = 0x9000, scoped, tag = 'internal scratch']
  #allocation2 [shape = 'f32[2,32]{1,0:T(2,128)}', space=vmem, size = 0x400, scoped, tag = 'scratch operand']
  #allocation3 [shape = 'f32[2,32]{1,0:T(2,128)}', space=vmem, size = 0x400, scoped, tag = 'scratch operand']
  #allocation4 [shape = 'f32[2,3]{1,0:T(2,128)}', space=vmem, size = 0x400, scoped, tag = 'scratch operand']
  %s0 = inlined_call_operand.vmem [shape: bf16[8,2,16], index: 0, kind: input, shape index: {}]
  %s1 = inlined_call_operand.vmem [shape: bf16[32,16], index: 1, kind: input, shape index: {}]
  %s2 = inlined_call_operand.vmem [shape: bf16[32,32], index: 2, kind: input, shape index: {}]
  %s3 = inlined_call_operand.vmem [shape: f32[1,32], index: 3, kind: input, shape index: {}]
  %s4 = inlined_call_operand.vmem [shape: bf16[32,32], index: 4, kind: input, shape index: {}]
  %s5 = inlined_call_operand.hbm [shape: bf16[32,32], index: 5, kind: input, shape index: {}]
  %s6 = inlined_call_operand.vmem [shape: f32[1,32], index: 6, kind: input, shape index: {}]
  %s7 = inlined_call_operand.vmem [shape: bf16[8,3,32], index: 7, kind: input, shape index: {}]
  %s8 = inlined_call_operand.vmem [shape: f32[1,3], index: 8, kind: input, shape index: {}]
  %s9 = inlined_call_operand.hbm [shape: f32[2,3], index: 9, kind: output, shape index: {}]
  %s10 = sld [smem:[#allocation0]]
  $region81: #{tpu_custom_call.1} parent=0
    _
  %s12 = ssub.s32 1, %s10
  %s13 = scalar_select 0, %s12, %s10
  $region1: #{tpu_custom_call.1} parent=0
    #allocation5 [shape = 'u8[8192]{0}', space=vmem, size = 0x2000, scoped, tag = 'input window, operand 5, single buffered']
    #allocation6 [shape = 's32[2]{0}', space=sflag, size = 0x8, scoped, tag = 'scoped memory for tpu_custom_call.1']
    #allocation7 [shape = 's32[2]{0}', space=sflag, size = 0x8, scoped, tag = 'scoped memory for tpu_custom_call.1']
    #allocation8 [shape = 'u8[1024]{0}', space=vmem, size = 0x400, scoped, tag = 'output window, operand 0, single buffered']
    %14 = vsyncpa [#allocation6], 0
    %15 = vsyncpa [#allocation7], 0
    loop: start=0, step=1, limit=10
    $region2: #{tpu_custom_call.1} parent=1 // loop_pre_header
      _
    $region3: #{tpu_custom_call.1} parent=1 // loop_header
      %s17 = sphi 0, %s21
      %p18 = scmp.ge.s32.totalorder %s17, 10
      %s24 = sphi 0, %s36
      %s25 = sphi 0, %s32
      %s26 = sphi 0, %s24
      %s27 = sphi 0, %s25
      %s28 = sphi 0, %s26
      %s29 = sphi 0, %s27
      %s41 = sphi 0, %s43
      %s44 = sphi 0, %s41
      %s45 = sphi 0, %s44
      %s61 = sphi 0, %s45
      %s65 = sphi 0, %s65
      %s67 = sphi 0, %s65
      %s68 = sphi 0, %s67
      %s82 = sphi 0, %s68
      %s86 = sphi 0, %s86
      %s88 = sphi 0, %s86
      %s89 = sphi 0, %s88
      %s103 = sphi 0, %s89
      %s107 = sphi 0, %s107
      %s109 = sphi 0, %s107
      %s110 = sphi 0, %s109
      %s124 = sphi 0, %s110
      %s128 = sphi 0, %s128
      %s130 = sphi 0, %s128
      %s131 = sphi 0, %s130
      %s145 = sphi 0, %s131
      %s149 = sphi 0, %s149
      %s151 = sphi 0, %s149
      %s152 = sphi 0, %s151
      %s166 = sphi 0, %s152
      %s170 = sphi 0, %s170
      %s172 = sphi 0, %s170
      %s173 = sphi 0, %s172
      %s187 = sphi 0, %s173
      %s193 = sphi 0, %s195
      %s196 = sphi 0, %s193
      %s197 = sphi 0, %s196
      %s213 = sphi 0, %s197
      %s217 = sphi 0, %s217
      %s219 = sphi 0, %s217
      %s220 = sphi 0, %s219
      %s234 = sphi 0, %s220
      %s240 = sphi 0, %s242
      %s243 = sphi 0, %s240
      %s244 = sphi 0, %s243
      %s260 = sphi 0, %s244
    $region4: #{tpu_custom_call.1} parent=1 // loop_header_branch
      %20 = sbr.rel (%p18) target = $region8
    $region5: #{tpu_custom_call.1} parent=1 // loop_body
      %s22 = ssub.s32 %s17, 1
      %s23 = ssub.s32 %s17, 2
      %s30 = sadd.s32 1, %s25
      %p31 = scmp.ge.s32.totalorder %s30, 8
      %s32 = scalar_select %p31, 0, %s30
      %s33 = sadd.s32 1, %s24
      %s34 = scalar_select %p31, %s33, %s24
      %p35 = scmp.ge.s32.totalorder %s34, 1
      %s36 = scalar_select %p35, 0, %s34
      %s37 = ssub.s32 %s25, %s32
      %s38 = ssub.s32 %s24, %s36
      %s39 = sor.u32 %s37, %s38
      %p40 = scmp.eq.s32.totalorder %s39, 0
      %s42 = sadd.s32 %s41, 1
      %s43 = scalar_select %p40, %s41, %s42
      %p46 = pneg %p40
      %p47 = scmp.eq.s32.totalorder %s17, 7
      %p48 = por %p46, %p47
      %p49 = scmp.ne.s32.totalorder %s41, %s44
      %p50 = scmp.eq.s32.totalorder %s17, 0
      %p51 = por %p49, %p50
      %p52 = scmp.ne.s32.totalorder %s41, %s44
      %p53 = scmp.eq.s32.totalorder %s22, 7
      %p54 = por %p52, %p53
      %p55 = scmp.ne.s32.totalorder %s44, %s45
      %p56 = scmp.eq.s32.totalorder %s22, 0
      %p57 = por %p55, %p56
      %p58 = scmp.ne.s32.totalorder %s44, %s45
      %p59 = scmp.eq.s32.totalorder %s23, 7
      %p60 = por %p58, %p59
      %p62 = scmp.ne.s32.totalorder %s45, %s61
      %p63 = scmp.eq.s32.totalorder %s23, 0
      %p64 = por %p62, %p63
      %s66 = sadd.s32 %s65, 1
      %p69 = scmp.eq.s32.totalorder %s17, 7
      %p70 = scmp.ne.s32.totalorder %s65, %s67
      %p71 = scmp.eq.s32.totalorder %s17, 0
      %p72 = por %p70, %p71
      %p73 = scmp.ne.s32.totalorder %s65, %s67
      %p74 = scmp.eq.s32.totalorder %s22, 7
      %p75 = por %p73, %p74
      %p76 = scmp.ne.s32.totalorder %s67, %s68
      %p77 = scmp.eq.s32.totalorder %s22, 0
      %p78 = por %p76, %p77
      %p79 = scmp.ne.s32.totalorder %s67, %s68
      %p80 = scmp.eq.s32.totalorder %s23, 7
      %p81 = por %p79, %p80
      %p83 = scmp.ne.s32.totalorder %s68, %s82
      %p84 = scmp.eq.s32.totalorder %s23, 0
      %p85 = por %p83, %p84
      %s87 = sadd.s32 %s86, 1
      %p90 = scmp.eq.s32.totalorder %s17, 7
      %p91 = scmp.ne.s32.totalorder %s86, %s88
      %p92 = scmp.eq.s32.totalorder %s17, 0
      %p93 = por %p91, %p92
      %p94 = scmp.ne.s32.totalorder %s86, %s88
      %p95 = scmp.eq.s32.totalorder %s22, 7
      %p96 = por %p94, %p95
      %p97 = scmp.ne.s32.totalorder %s88, %s89
      %p98 = scmp.eq.s32.totalorder %s22, 0
      %p99 = por %p97, %p98
      %p100 = scmp.ne.s32.totalorder %s88, %s89
      %p101 = scmp.eq.s32.totalorder %s23, 7
      %p102 = por %p100, %p101
      %p104 = scmp.ne.s32.totalorder %s89, %s103
      %p105 = scmp.eq.s32.totalorder %s23, 0
      %p106 = por %p104, %p105
      %s108 = sadd.s32 %s107, 1
      %p111 = scmp.eq.s32.totalorder %s17, 7
      %p112 = scmp.ne.s32.totalorder %s107, %s109
      %p113 = scmp.eq.s32.totalorder %s17, 0
      %p114 = por %p112, %p113
      %p115 = scmp.ne.s32.totalorder %s107, %s109
      %p116 = scmp.eq.s32.totalorder %s22, 7
      %p117 = por %p115, %p116
      %p118 = scmp.ne.s32.totalorder %s109, %s110
      %p119 = scmp.eq.s32.totalorder %s22, 0
      %p120 = por %p118, %p119
      %p121 = scmp.ne.s32.totalorder %s109, %s110
      %p122 = scmp.eq.s32.totalorder %s23, 7
      %p123 = por %p121, %p122
      %p125 = scmp.ne.s32.totalorder %s110, %s124
      %p126 = scmp.eq.s32.totalorder %s23, 0
      %p127 = por %p125, %p126
      %s129 = sadd.s32 %s128, 1
      %p132 = scmp.eq.s32.totalorder %s17, 7
      %p133 = scmp.ne.s32.totalorder %s128, %s130
      %p134 = scmp.eq.s32.totalorder %s17, 0
      %p135 = por %p133, %p134
      %p136 = scmp.ne.s32.totalorder %s128, %s130
      %p137 = scmp.eq.s32.totalorder %s22, 7
      %p138 = por %p136, %p137
      %p139 = scmp.ne.s32.totalorder %s130, %s131
      %p140 = scmp.eq.s32.totalorder %s22, 0
      %p141 = por %p139, %p140
      %p142 = scmp.ne.s32.totalorder %s130, %s131
      %p143 = scmp.eq.s32.totalorder %s23, 7
      %p144 = por %p142, %p143
      %p146 = scmp.ne.s32.totalorder %s131, %s145
      %p147 = scmp.eq.s32.totalorder %s23, 0
      %p148 = por %p146, %p147
      %s150 = sadd.s32 %s149, 1
      %p153 = scmp.eq.s32.totalorder %s17, 7
      %p154 = scmp.ne.s32.totalorder %s149, %s151
      %p155 = scmp.eq.s32.totalorder %s17, 0
      %p156 = por %p154, %p155
      %p157 = scmp.ne.s32.totalorder %s149, %s151
      %p158 = scmp.eq.s32.totalorder %s22, 7
      %p159 = por %p157, %p158
      %p160 = scmp.ne.s32.totalorder %s151, %s152
      %p161 = scmp.eq.s32.totalorder %s22, 0
      %p162 = por %p160, %p161
      %p163 = scmp.ne.s32.totalorder %s151, %s152
      %p164 = scmp.eq.s32.totalorder %s23, 7
      %p165 = por %p163, %p164
      %p167 = scmp.ne.s32.totalorder %s152, %s166
      %p168 = scmp.eq.s32.totalorder %s23, 0
      %p169 = por %p167, %p168
      %s171 = sadd.s32 %s170, 1
      %p174 = scmp.eq.s32.totalorder %s17, 7
      %p175 = scmp.ne.s32.totalorder %s170, %s172
      %p176 = scmp.eq.s32.totalorder %s17, 0
      %p177 = por %p175, %p176
      %p178 = scmp.ne.s32.totalorder %s170, %s172
      %p179 = scmp.eq.s32.totalorder %s22, 7
      %p180 = por %p178, %p179
      %p181 = scmp.ne.s32.totalorder %s172, %s173
      %p182 = scmp.eq.s32.totalorder %s22, 0
      %p183 = por %p181, %p182
      %p184 = scmp.ne.s32.totalorder %s172, %s173
      %p185 = scmp.eq.s32.totalorder %s23, 7
      %p186 = por %p184, %p185
      %p188 = scmp.ne.s32.totalorder %s173, %s187
      %p189 = scmp.eq.s32.totalorder %s23, 0
      %p190 = por %p188, %p189
      %s191 = ssub.s32 %s25, %s32
      %p192 = scmp.eq.s32.totalorder %s191, 0
      %s194 = sadd.s32 %s193, 1
      %s195 = scalar_select %p192, %s193, %s194
      %p198 = pneg %p192
      %p199 = scmp.eq.s32.totalorder %s17, 7
      %p200 = por %p198, %p199
      %p201 = scmp.ne.s32.totalorder %s193, %s196
      %p202 = scmp.eq.s32.totalorder %s17, 0
      %p203 = por %p201, %p202
      %p204 = scmp.ne.s32.totalorder %s193, %s196
      %p205 = scmp.eq.s32.totalorder %s22, 7
      %p206 = por %p204, %p205
      %p207 = scmp.ne.s32.totalorder %s196, %s197
      %p208 = scmp.eq.s32.totalorder %s22, 0
      %p209 = por %p207, %p208
      %p210 = scmp.ne.s32.totalorder %s196, %s197
      %p211 = scmp.eq.s32.totalorder %s23, 7
      %p212 = por %p210, %p211
      %p214 = scmp.ne.s32.totalorder %s197, %s213
      %p215 = scmp.eq.s32.totalorder %s23, 0
      %p216 = por %p214, %p215
      %s218 = sadd.s32 %s217, 1
      %p221 = scmp.eq.s32.totalorder %s17, 7
      %p222 = scmp.ne.s32.totalorder %s217, %s219
      %p223 = scmp.eq.s32.totalorder %s17, 0
      %p224 = por %p222, %p223
      %p225 = scmp.ne.s32.totalorder %s217, %s219
      %p226 = scmp.eq.s32.totalorder %s22, 7
      %p227 = por %p225, %p226
      %p228 = scmp.ne.s32.totalorder %s219, %s220
      %p229 = scmp.eq.s32.totalorder %s22, 0
      %p230 = por %p228, %p229
      %p231 = scmp.ne.s32.totalorder %s219, %s220
      %p232 = scmp.eq.s32.totalorder %s23, 7
      %p233 = por %p231, %p232
      %p235 = scmp.ne.s32.totalorder %s220, %s234
      %p236 = scmp.eq.s32.totalorder %s23, 0
      %p237 = por %p235, %p236
      %s238 = ssub.s32 %s24, %s36
      %p239 = scmp.eq.s32.totalorder %s238, 0
      %s241 = sadd.s32 %s240, 1
      %s242 = scalar_select %p239, %s240, %s241
      %p245 = pneg %p239
      %p246 = scmp.eq.s32.totalorder %s17, 7
      %p247 = por %p245, %p246
      %p248 = scmp.ne.s32.totalorder %s240, %s243
      %p249 = scmp.eq.s32.totalorder %s17, 0
      %p250 = por %p248, %p249
      %p251 = scmp.ne.s32.totalorder %s240, %s243
      %p252 = scmp.eq.s32.totalorder %s22, 7
      %p253 = por %p251, %p252
      %p254 = scmp.ne.s32.totalorder %s243, %s244
      %p255 = scmp.eq.s32.totalorder %s22, 0
      %p256 = por %p254, %p255
      %p257 = scmp.ne.s32.totalorder %s243, %s244
      %p258 = scmp.eq.s32.totalorder %s23, 7
      %p259 = por %p257, %p258
      %p261 = scmp.ne.s32.totalorder %s244, %s260
      %p262 = scmp.eq.s32.totalorder %s23, 0
      %p263 = por %p261, %p262
      %p264 = scmp.le.s32.totalorder 1, %s17
      %p265 = scmp.lt.s32.totalorder %s17, 9
      %p266 = pnand %p264, %p265
      %p267 = pneg %p266
      // Predicated region
      $region9: #{tpu_custom_call.1} parent=5 // pred_check
        _
      $region10: #{tpu_custom_call.1} parent=5 // pred_check_branch
        %269 = sbr.rel (%p266) target = $region12
      $region11: #{tpu_custom_call.1} parent=5 // pred_region
        %s270 = ssub.s32 %s17, 1
        // Predicated region
        $region13: #{tpu_custom_call.1} parent=11 // pred_check
          %p271 = pneg %p78
        $region14: #{tpu_custom_call.1} parent=11 // pred_check_branch
          %273 = sbr.rel (%p271) target = $region16
        $region15: #{tpu_custom_call.1} parent=11 // pred_region
          _
        $region16: #{tpu_custom_call.1} parent=11 // pred_fallthru
          _
        // Predicated region
        $region17: #{tpu_custom_call.1} parent=11 // pred_check
          %p274 = pneg %p99
        $region18: #{tpu_custom_call.1} parent=11 // pred_check_branch
          %276 = sbr.rel (%p274) target = $region20
        $region19: #{tpu_custom_call.1} parent=11 // pred_region
          _
        $region20: #{tpu_custom_call.1} parent=11 // pred_fallthru
          _
        // Predicated region
        $region21: #{tpu_custom_call.1} parent=11 // pred_check
          %p277 = pneg %p120
        $region22: #{tpu_custom_call.1} parent=11 // pred_check_branch
          %279 = sbr.rel (%p277) target = $region24
        $region23: #{tpu_custom_call.1} parent=11 // pred_region
          _
        $region24: #{tpu_custom_call.1} parent=11 // pred_fallthru
          _
        // Predicated region
        $region25: #{tpu_custom_call.1} parent=11 // pred_check
          %p280 = pneg %p141
        $region26: #{tpu_custom_call.1} parent=11 // pred_check_branch
          %282 = sbr.rel (%p280) target = $region28
        $region27: #{tpu_custom_call.1} parent=11 // pred_region
          _
        $region28: #{tpu_custom_call.1} parent=11 // pred_fallthru
          _
        // Predicated region
        $region29: #{tpu_custom_call.1} parent=11 // pred_check
          %p283 = pneg %p162
        $region30: #{tpu_custom_call.1} parent=11 // pred_check_branch
          %285 = sbr.rel (%p283) target = $region32
        $region31: #{tpu_custom_call.1} parent=11 // pred_region
          %287 = vsyncadd [#allocation6], 0
          %s288 = sshll.u32 %s5, 4
          %s289 = int_to_ptr.hbm [resolvable:$true] %s288
          %s290 = sshll.u32 [#allocation5], 4
          %s291 = int_to_ptr.vmem [resolvable:$true] %s290
          %296 = dma.hbm_to_vmem [thread:$0]  %s289, 256, %s291, [#allocation6], 64, 64, 4
        $region32: #{tpu_custom_call.1} parent=11 // pred_fallthru
          _
        // Predicated region
        $region33: #{tpu_custom_call.1} parent=11 // pred_check
          %p297 = pneg %p183
        $region34: #{tpu_custom_call.1} parent=11 // pred_check_branch
          %299 = sbr.rel (%p297) target = $region36
        $region35: #{tpu_custom_call.1} parent=11 // pred_region
          _
        $region36: #{tpu_custom_call.1} parent=11 // pred_fallthru
          _
        // Predicated region
        $region37: #{tpu_custom_call.1} parent=11 // pred_check
          %p300 = pneg %p230
        $region38: #{tpu_custom_call.1} parent=11 // pred_check_branch
          %302 = sbr.rel (%p300) target = $region40
        $region39: #{tpu_custom_call.1} parent=11 // pred_region
          _
        $region40: #{tpu_custom_call.1} parent=11 // pred_fallthru
          _
      $region12: #{tpu_custom_call.1} parent=5 // pred_fallthru
        _
      %p303 = scmp.lt.s32.totalorder %s17, 8
      // Predicated region
      $region41: #{tpu_custom_call.1} parent=5 // pred_check
        %p304 = pneg %p303
      $region42: #{tpu_custom_call.1} parent=5 // pred_check_branch
        %306 = sbr.rel (%p304) target = $region44
      $region43: #{tpu_custom_call.1} parent=5 // pred_region
        // Predicated region
        $region45: #{tpu_custom_call.1} parent=43 // pred_check
          %p307 = pneg %p51
        $region46: #{tpu_custom_call.1} parent=43 // pred_check_branch
          %309 = sbr.rel (%p307) target = $region48
        $region47: #{tpu_custom_call.1} parent=43 // pred_region
          %p310 = scmp.lt.s32.totalorder %s25, 7
          %s311 = scalar_select %p310, %s25, 7
          %p312 = scmp.lt.s32.totalorder %s24, 0
          %s313 = scalar_select %p312, %s24, 0
          %s314 = sadd.s32 %s313, %s311
          %s315 = scalar_lea.vmem %s0, %s314
        $region48: #{tpu_custom_call.1} parent=43 // pred_fallthru
          _
        // Predicated region
        $region49: #{tpu_custom_call.1} parent=43 // pred_check
          %p316 = pneg %p203
        $region50: #{tpu_custom_call.1} parent=43 // pred_check_branch
          %318 = sbr.rel (%p316) target = $region52
        $region51: #{tpu_custom_call.1} parent=43 // pred_region
          %p319 = scmp.lt.s32.totalorder %s25, 7
          %s320 = scalar_select %p319, %s25, 7
          %s321 = smul.addr %s320, 2
          %s322 = scalar_lea.vmem %s7, %s321
        $region52: #{tpu_custom_call.1} parent=43 // pred_fallthru
          _
      $region44: #{tpu_custom_call.1} parent=5 // pred_fallthru
        _
      %p323 = scmp.le.s32.totalorder 1, %s17
      %p324 = scmp.lt.s32.totalorder %s17, 9
      %p325 = pnand %p323, %p324
      %p326 = pneg %p325
      // Predicated region
      $region53: #{tpu_custom_call.1} parent=5 // pred_check
        _
      $region54: #{tpu_custom_call.1} parent=5 // pred_check_branch
        %328 = sbr.rel (%p325) target = $region56
      $region55: #{tpu_custom_call.1} parent=5 // pred_region
        %s329 = ssub.s32 %s17, 1
        // Predicated region
        $region57: #{tpu_custom_call.1} parent=55 // pred_check
          %p330 = pneg %p162
        $region58: #{tpu_custom_call.1} parent=55 // pred_check_branch
          %332 = sbr.rel (%p330) target = $region60
        $region59: #{tpu_custom_call.1} parent=55 // pred_region
          %334 = dma.done [#allocation6], 256
        $region60: #{tpu_custom_call.1} parent=55 // pred_fallthru
          _
        %p335 = scmp.lt.s32.totalorder %s27, 7
        %s336 = scalar_select %p335, %s27, 7
        %p337 = scmp.lt.s32.totalorder %s26, 0
        %s338 = scalar_select %p337, %s26, 0
        %s339 = sadd.s32 %s338, %s336
        %s340 = scalar_lea.vmem %s0, %s339
        %p341 = pneg %p57
        %p342 = pneg %p54
        %p343 = pneg %p78
        %p344 = pneg %p75
        %p345 = pneg %p99
        %p346 = pneg %p96
        %p347 = pneg %p120
        %p348 = pneg %p117
        %p349 = pneg %p141
        %p350 = pneg %p138
        %p351 = pneg %p162
        %p352 = pneg %p159
        %p353 = pneg %p183
        %p354 = pneg %p180
        %p355 = scmp.lt.s32.totalorder %s27, 7
        %s356 = scalar_select %p355, %s27, 7
        %s357 = smul.addr %s356, 2
        %s358 = scalar_lea.vmem %s7, %s357
        %p359 = pneg %p209
        %p360 = pneg %p206
        %p361 = pneg %p230
        %p362 = pneg %p227
        %p363 = pneg %p256
        %p364 = pneg %p253
        %p365 = scmp.lt.s32.totalorder %s27, 7
        %s366 = scalar_select %p365, %s27, 7
        %p367 = scmp.lt.s32.totalorder %s26, 0
        %s368 = scalar_select %p367, %s26, 0
        %s369 = sadd.s32 %s368, %s366
        %s370 = scalar_lea.vmem %s0, %s369
        %p371 = scmp.lt.s32.totalorder %s27, 7
        %s372 = scalar_select %p371, %s27, 7
        %s373 = smul.addr %s372, 2
        %s374 = scalar_lea.vmem %s7, %s373
        %p376 = scmp.eq.s32.totalorder %s27, 0
        // Predicated region
        $region61: #{tpu_custom_call.1} parent=55 // pred_check
          %p377 = pneg %p376
        $region62: #{tpu_custom_call.1} parent=55 // pred_check_branch
          %379 = sbr.rel (%p377) target = $region64
        $region63: #{tpu_custom_call.1} parent=55 // pred_region
          %vm380 = vcmask 254976
          %381 = vst.msk [vmem:[#allocation2] sm:$0x3] %vm380, 0.0
          %382 = vst.msk [vmem:[#allocation3] sm:$0x3] %vm380, 0.0
          %vm383 = vcmask 17408
          %384 = vst.msk [vmem:[#allocation4] sm:$0x3] %vm383, 0.0
        $region64: #{tpu_custom_call.1} parent=55 // pred_fallthru
          _
        %v385 = vld [vmem:[%s370] sm:$0x1]
        %v386 = vld [vmem:[%s1] sm:$0xf]
        %v387 = vld [vmem:[%s1 + $0x4] sm:$0xf]
        %v388 = vld [vmem:[%s1 + $0x8] sm:$0xf]
        %v389 = vld [vmem:[%s1 + $0xc] sm:$0xf]
        %v390 = vld [vmem:[#allocation2] sm:$0x3]
        %v391 = vpack.c.bf16 %v390, %v390
        %v392 = vld [vmem:[%s2] sm:$0xf]
        %v393 = vld [vmem:[%s2 + $0x4] sm:$0xf]
        %v394 = vld [vmem:[%s2 + $0x8] sm:$0xf]
        %v395 = vld [vmem:[%s2 + $0xc] sm:$0xf]
        %v400 = vunpack.c.l.b16 %v392
        %v401 = vunpack.c.l.b16 %v393
        %v402 = vunpack.c.l.b16 %v394
        %v403 = vunpack.c.l.b16 %v395
        %v404 = vpack.c.b16 %v401, %v400
        %v405 = vpack.c.b16 %v403, %v402
        %vm406 = vcmask 261120
        %v408 = vsel %vm406, %v391, 0
        %v411 = vsel %vm406, %v404, 0
        %v414 = vsel %vm406, %v405, 0
        %416 = vmatpush.bf16.xpose.msra.mxu0 0
        %417 = vmatpush.bf16.xpose.msra.mxu0 0
        %418 = vmatpush.bf16.xpose.msra.mxu0 0
        %419 = vmatpush.bf16.xpose.msra.mxu0 0
        %420 = vmatpush.bf16.xpose.msra.mxu0 0
        %421 = vmatpush.bf16.xpose.msra.mxu0 0
        %422 = vmatpush.bf16.xpose.msra.mxu0 %v414
        %423 = vmatpush.bf16.xpose.msra.mxu0 %v411
        %424 = vmatmul.bf16.gmra.mxu0 %v408
        %v425 = vpop.f32.mrf.mxu0
        %v426 = vadd.f32 0.0, %v425
        %v427 = vpop.f32.mrf.mxu0
        %428 = vdwg.mxu0
        %v433 = vunpack.c.l.b16 %v386
        %v434 = vunpack.c.l.b16 %v387
        %v435 = vunpack.c.l.b16 %v388
        %v436 = vunpack.c.l.b16 %v389
        %v437 = vpack.c.b16 %v434, %v433
        %v438 = vpack.c.b16 %v436, %v435
        %vm439 = vcmask 130048
        %v441 = vsel %vm439, %v385, 0
        %v444 = vsel %vm439, %v437, 0
        %v447 = vsel %vm439, %v438, 0
        %449 = vmatpush.bf16.xpose.msra.mxu0 0
        %450 = vmatpush.bf16.xpose.msra.mxu0 0
        %451 = vmatpush.bf16.xpose.msra.mxu0 0
        %452 = vmatpush.bf16.xpose.msra.mxu0 0
        %453 = vmatpush.bf16.xpose.msra.mxu0 0
        %454 = vmatpush.bf16.xpose.msra.mxu0 0
        %455 = vmatpush.bf16.xpose.msra.mxu0 %v447
        %456 = vmatpush.bf16.xpose.msra.mxu0 %v444
        %457 = vmatmul.bf16.gmra.mxu0 %v441
        %v458 = vpop.f32.mrf.mxu0
        %v459 = vadd.f32 %v426, %v458
        %v460 = vpop.f32.mrf.mxu0
        %461 = vdwg.mxu0
        %v462 = vld [vmem:[%s3] sm:$0x1]
        %v464 = vperm.slane %v462, 0
        %v466 = vadd.f32 %v459, %v464
        %v467 = vtanh.pop %v466
        %v468 = vpack.c.bf16 %v467, %v467
        %v469 = vld [vmem:[%s4] sm:$0xf]
        %v470 = vld [vmem:[%s4 + $0x4] sm:$0xf]
        %v471 = vld [vmem:[%s4 + $0x8] sm:$0xf]
        %v472 = vld [vmem:[%s4 + $0xc] sm:$0xf]
        %v473 = vld [vmem:[#allocation3] sm:$0x3]
        %v474 = vpack.c.bf16 %v473, %v473
        %v475 = vld [vmem:[#allocation5] sm:$0xf]
        %v476 = vld [vmem:[#allocation5 + $0x4] sm:$0xf]
        %v477 = vld [vmem:[#allocation5 + $0x8] sm:$0xf]
        %v478 = vld [vmem:[#allocation5 + $0xc] sm:$0xf]
        %v483 = vunpack.c.l.b16 %v475
        %v484 = vunpack.c.l.b16 %v476
        %v485 = vunpack.c.l.b16 %v477
        %v486 = vunpack.c.l.b16 %v478
        %v487 = vpack.c.b16 %v484, %v483
        %v488 = vpack.c.b16 %v486, %v485
        %v490 = vsel %vm406, %v474, 0
        %v493 = vsel %vm406, %v487, 0
        %v496 = vsel %vm406, %v488, 0
        %498 = vmatpush.bf16.xpose.msra.mxu0 0
        %499 = vmatpush.bf16.xpose.msra.mxu0 0
        %500 = vmatpush.bf16.xpose.msra.mxu0 0
        %501 = vmatpush.bf16.xpose.msra.mxu0 0
        %502 = vmatpush.bf16.xpose.msra.mxu0 0
        %503 = vmatpush.bf16.xpose.msra.mxu0 0
        %504 = vmatpush.bf16.xpose.msra.mxu0 %v496
        %505 = vmatpush.bf16.xpose.msra.mxu0 %v493
        %506 = vmatmul.bf16.gmra.mxu0 %v490
        %v507 = vpop.f32.mrf.mxu0
        %v508 = vadd.f32 0.0, %v507
        %v509 = vpop.f32.mrf.mxu0
        %510 = vdwg.mxu0
        %v515 = vunpack.c.l.b16 %v469
        %v516 = vunpack.c.l.b16 %v470
        %v517 = vunpack.c.l.b16 %v471
        %v518 = vunpack.c.l.b16 %v472
        %v519 = vpack.c.b16 %v516, %v515
        %v520 = vpack.c.b16 %v518, %v517
        %v522 = vsel %vm406, %v468, 0
        %v525 = vsel %vm406, %v519, 0
        %v528 = vsel %vm406, %v520, 0
        %530 = vmatpush.bf16.xpose.msra.mxu0 0
        %531 = vmatpush.bf16.xpose.msra.mxu0 0
        %532 = vmatpush.bf16.xpose.msra.mxu0 0
        %533 = vmatpush.bf16.xpose.msra.mxu0 0
        %534 = vmatpush.bf16.xpose.msra.mxu0 0
        %535 = vmatpush.bf16.xpose.msra.mxu0 0
        %536 = vmatpush.bf16.xpose.msra.mxu0 %v528
        %537 = vmatpush.bf16.xpose.msra.mxu0 %v525
        %538 = vmatmul.bf16.gmra.mxu0 %v522
        %v539 = vpop.f32.mrf.mxu0
        %v540 = vadd.f32 %v508, %v539
        %v541 = vpop.f32.mrf.mxu0
        %542 = vdwg.mxu0
        %v543 = vld [vmem:[%s6] sm:$0x1]
        %v545 = vperm.slane %v543, 0
        %v547 = vadd.f32 %v540, %v545
        %v548 = vtanh.pop %v547
        %vm549 = vcmask 254976
        %550 = vst.msk [vmem:[#allocation2] sm:$0x3] %vm549, %v467
        %551 = vst.msk [vmem:[#allocation3] sm:$0x3] %vm549, %v548
        %v552 = vld [vmem:[#allocation4] sm:$0x3]
        %v553 = vpack.c.bf16 %v548, %v548
        %v554 = vld [vmem:[%s374] sm:$0x3]
        %v556 = vsel %vm406, %v553, 0
        %v559 = vsel %vm406, %v554, 0
        %561 = vmatpush.bf16.xpose.msra.mxu0 0
        %562 = vmatpush.bf16.xpose.msra.mxu0 0
        %563 = vmatpush.bf16.xpose.msra.mxu0 0
        %564 = vmatpush.bf16.xpose.msra.mxu0 0
        %565 = vmatpush.bf16.xpose.msra.mxu0 0
        %566 = vmatpush.bf16.xpose.msra.mxu0 0
        %567 = vmatpush.bf16.xpose.msra.mxu0 0
        %568 = vmatpush.bf16.xpose.msra.mxu0 %v559
        %569 = vmatmul.bf16.gmra.mxu0 %v556
        %v570 = vpop.f32.mrf.mxu0
        %v571 = vadd.f32 0.0, %v570
        %v572 = vpop.f32.mrf.mxu0
        %573 = vdwg.mxu0
        %v574 = vadd.f32 %v552, %v571
        %vm575 = vcmask 17408
        %576 = vst.msk [vmem:[#allocation4] sm:$0x3] %vm575, %v574
        %p577 = scmp.eq.s32.totalorder %s27, 7
        // Predicated region
        $region65: #{tpu_custom_call.1} parent=55 // pred_check
          %p578 = pneg %p577
        $region66: #{tpu_custom_call.1} parent=55 // pred_check_branch
          %580 = sbr.rel (%p578) target = $region68
        $region67: #{tpu_custom_call.1} parent=55 // pred_region
          %v581 = vld [vmem:[#allocation4] sm:$0x3]
          %v582 = vld [vmem:[%s8] sm:$0x1]
          %v584 = vperm.slane %v582, 0
          %v586 = vadd.f32 %v581, %v584
          %587 = vst.msk [vmem:[#allocation8] sm:$0x3] %vm575, %v586
        $region68: #{tpu_custom_call.1} parent=55 // pred_fallthru
          _
        // Predicated region
        $region69: #{tpu_custom_call.1} parent=55 // pred_check
          %p588 = pneg %p253
        $region70: #{tpu_custom_call.1} parent=55 // pred_check_branch
          %590 = sbr.rel (%p588) target = $region72
        $region71: #{tpu_custom_call.1} parent=55 // pred_region
          %592 = vsyncadd [#allocation7], 0
          %s593 = smul.addr %s26, 2
          %s594 = scalar_lea.hbm %s9, %s593
          %s596 = sshll.u32 [#allocation8], 4
          %s597 = int_to_ptr.vmem [resolvable:$true] %s596
          %s598 = sshll.u32 %s594, 4
          %s599 = int_to_ptr.hbm [resolvable:$true] %s598
          %601 = dma.vmem_to_hbm [thread:$0]  %s597, 32, %s599, [#allocation7]
        $region72: #{tpu_custom_call.1} parent=55 // pred_fallthru
          _
        // Predicated region
        $region73: #{tpu_custom_call.1} parent=55 // pred_check
          %p602 = pneg %p253
        $region74: #{tpu_custom_call.1} parent=55 // pred_check_branch
          %604 = sbr.rel (%p602) target = $region76
        $region75: #{tpu_custom_call.1} parent=55 // pred_region
          %606 = dma.done [#allocation7], 32
        $region76: #{tpu_custom_call.1} parent=55 // pred_fallthru
          _
      $region56: #{tpu_custom_call.1} parent=5 // pred_fallthru
        _
      %p607 = scmp.le.s32.totalorder 2, %s17
      // Predicated region
      $region77: #{tpu_custom_call.1} parent=5 // pred_check
        %p608 = pneg %p607
      $region78: #{tpu_custom_call.1} parent=5 // pred_check_branch
        %610 = sbr.rel (%p608) target = $region80
      $region79: #{tpu_custom_call.1} parent=5 // pred_region
        %s611 = ssub.s32 %s17, 2
      $region80: #{tpu_custom_call.1} parent=5 // pred_fallthru
        _
    $region6: #{tpu_custom_call.1} parent=1 // loop_footer
      %s21 = sadd.s32 1, %s17
    $region7: #{tpu_custom_call.1} parent=1 // loop_footer_branch
      %16 = sbr.rel target = $region3
    $region8: #{tpu_custom_call.1} parent=1 // loop_exit
      _
    %612 = vsyncpa [#allocation6], 1
    %s613 = scalar_lea.sflag [#allocation6], 1
    %614 = vsyncpa %s613, 1
    %615 = vsyncpa [#allocation7], 1
    %s616 = scalar_lea.sflag [#allocation7], 1
    %617 = vsyncpa %s616, 1

</llo_original>
